<compile_context>
chip_gen: v5e
topology: v5e:2x2
jax: 0.10.0
libtpu: 0.0.40
codegen_flags: <defaults>
</compile_context>

<pallas_src>
import functools

import jax
import jax.numpy as jnp
from jax.experimental import pallas as pl
from jax.experimental.pallas import tpu as pltpu

_LANE = 128
_SUBLANE = 8
_MAX_TILE_B = 1024                       # rows per grid step
_VMEM_LIMIT = 32 * 1024 * 1024           # raises v5e's 16 MiB scoped default


def _round_up(n, m):
    return ((n + m - 1) // m) * m


# ----------------------------------------------------------------------------
# Fused forward kernel: one batch tile per grid step.
# refs layout:
#   x,
#   (w_e0, b_e0), ..., (w_e{n_enc-1}, b_e{n_enc-1}),
#   emb, emb_T, emb_sqnorm,
#   (w_d0, b_d0), ..., (w_d{n_dec-1}, b_d{n_dec-1}),
#   recon_out, sqerr_out
# ----------------------------------------------------------------------------
def _fused_vqvae_kernel(*refs, n_enc, n_dec, k_true, b_true, compute_dtype):
    it = iter(refs)
    x_ref = next(it)
    enc = [(next(it), next(it)) for _ in range(n_enc)]
    emb_ref = next(it)      # (K_pad, Dz_pad)  compute_dtype
    embT_ref = next(it)     # (Dz_pad, K_pad)  compute_dtype (pre-transposed)
    e2_ref = next(it)       # (1, K_pad)       f32
    dec = [(next(it), next(it)) for _ in range(n_dec)]
    recon_ref = next(it)
    sqerr_ref = next(it)

    # ---------------- encoder MLP (intermediates stay in VMEM/vregs) --------
    h = x_ref[...]                                  # compute_dtype, true Din
    for li, (w_ref, b_ref) in enumerate(enc):
        h = jnp.dot(h.astype(compute_dtype), w_ref[...],
                    preferred_element_type=jnp.float32) + b_ref[...]
        if li < n_enc - 1:                          # last encoder layer: no ReLU
            h = jnp.maximum(h, 0.0)
    z = h                                           # (tile_b, Dz_pad) f32

    # ---------------- vector quantizer ---------------------------------------
    # argmin_k ||z - e_k||^2 == argmin_k (||e_k||^2 - 2 z.e_k); ||z||^2 is
    # row-constant and dropped.  cross = z @ e^T via the pre-transposed copy.
    cross = jnp.dot(z.astype(compute_dtype), embT_ref[...],
                    preferred_element_type=jnp.float32)        # (tile_b, K_pad)
    d = e2_ref[...] - 2.0 * cross
    k_pad = d.shape[1]
    iota_k = jax.lax.broadcasted_iota(jnp.int32, d.shape, 1)
    d = jnp.where(iota_k < k_true, d, jnp.inf)      # mask padded codebook rows
    dmin = jnp.min(d, axis=1, keepdims=True)
    # first-minimum tie break (matches torch.argmin)
    idx = jnp.min(jnp.where(d <= dmin, iota_k, k_pad), axis=1, keepdims=True)
    onehot = (iota_k == idx).astype(compute_dtype)              # (tile_b, K_pad)
    cw = jnp.dot(onehot, emb_ref[...],
                 preferred_element_type=jnp.float32)            # (tile_b, Dz_pad)

    # commitment-loss partial: sum over the (masked) batch rows of this tile of
    # (codeword - z)^2 -> one lane-dense (1, Dz_pad) row per grid step.
    # Padded Dz lanes of z and cw are exactly 0, padded batch rows are masked.
    diff = cw - z
    tile_b = diff.shape[0]
    row = pl.program_id(0) * tile_b + jax.lax.broadcasted_iota(
        jnp.int32, diff.shape, 0)
    sq = jnp.where(row < b_true, diff * diff, 0.0)
    sqerr_ref[...] = jnp.sum(sq, axis=0, keepdims=True)

    # ---------------- decoder MLP on the straight-through codeword ----------
    # z + stop_grad(cw - z) == cw numerically on the inference path.
    y = cw
    for li, (w_ref, b_ref) in enumerate(dec):
        y = jnp.dot(y.astype(compute_dtype), w_ref[...],
                    preferred_element_type=jnp.float32) + b_ref[...]
        if li < n_dec - 1:
            y = jnp.maximum(y, 0.0)
        else:
            # sigmoid: exp and approx reciprocal both ride the EUP slot
            y = pl.reciprocal(1.0 + jnp.exp(-y), approx=True)
    recon_ref[...] = y.astype(recon_ref.dtype)


# ----------------------------------------------------------------------------
# Parameter construction (mirrors nn.Linear / nn.Embedding init) + wrapper.
# Feature dims are zero-padded to multiples of 128 once, at init time, except
# the very first encoder fan_in which stays at the true input width.
# ----------------------------------------------------------------------------
class VQVAEPallas:
    def __init__(self, in_features, hidden_sizes, latent_dim, beta, key):
        hidden_list = list(map(int, hidden_sizes.split(",")))
        enc_h = [in_features] + hidden_list
        dec_h = enc_h[::-1]
        self.beta = float(beta)
        self.in_features = int(in_features)
        self.embedding_dim = int(enc_h[-1])
        self.num_embeddings = int(latent_dim)
        self.n_enc = len(enc_h) - 1
        self.n_dec = len(dec_h) - 1
        self.compute_dtype = jnp.bfloat16     # streamed weights / matmul inputs

        keys = jax.random.split(key, self.n_enc + self.n_dec + 1)

        def init_linear(k, fan_in, fan_out, pad_in=True):
            kw, kb = jax.random.split(k)
            bound = 1.0 / jnp.sqrt(float(fan_in))
            w = jax.random.uniform(kw, (fan_in, fan_out), jnp.float32, -bound, bound)
            b = jax.random.uniform(kb, (fan_out,), jnp.float32, -bound, bound)
            in_p = _round_up(fan_in, _LANE) if pad_in else fan_in
            out_p = _round_up(fan_out, _LANE)
            wp = jnp.zeros((in_p, out_p), jnp.float32).at[:fan_in, :fan_out].set(w)
            bp = jnp.zeros((1, out_p), jnp.float32).at[0, :fan_out].set(b)
            # weights streamed in bf16; biases (tiny) stay f32 for f32 adds
            return wp.astype(self.compute_dtype), bp

        # encoder: Linear+ReLU ... Linear (last ReLU popped).  First layer keeps
        # the TRUE fan_in so x is read unpadded in the feature dim.
        self.enc = [init_linear(keys[i], h0, h1, pad_in=(i > 0))
                    for i, (h0, h1) in enumerate(zip(enc_h, enc_h[1:]))]

        # codebook: uniform(-1/K, 1/K), shape (K, D), zero-padded to (K_pad, D_pad)
        emb = jax.random.uniform(keys[self.n_enc],
                                 (latent_dim, enc_h[-1]), jnp.float32,
                                 -1.0 / latent_dim, 1.0 / latent_dim)
        k_pad = _round_up(latent_dim, _LANE)
        dz_pad = _round_up(enc_h[-1], _LANE)
        emb_p = jnp.zeros((k_pad, dz_pad), jnp.float32)
        emb_p = emb_p.at[:latent_dim, :enc_h[-1]].set(emb)
        self.embedding = emb_p.astype(self.compute_dtype)        # (K_pad, Dz_pad)
        self.embedding_t = jnp.transpose(self.embedding)         # (Dz_pad, K_pad)
        # precompute ||e_k||^2 once, in f32 (padded rows are 0), lane-dense row
        self.emb_sqnorm = jnp.sum(
            self.embedding.astype(jnp.float32) ** 2, axis=1).reshape(1, -1)

        # decoder: Linear+ReLU ... Linear + Sigmoid (last ReLU popped)
        self.dec = [init_linear(keys[self.n_enc + 1 + i], h0, h1)
                    for i, (h0, h1) in enumerate(zip(dec_h, dec_h[1:]))]

        # single XLA program: cast/pad -> fused pallas kernel -> slice / reduce
        self._forward = jax.jit(self._forward_impl)

    def _forward_impl(self, x):
        B, Din = x.shape
        dz_pad = self.embedding.shape[1]
        d_out_pad = self.dec[-1][0].shape[1]

        # ---- batch tiling: big tiles (amortize ~0.35us/step), >=2 tiles when
        # the batch allows it (both v7x TensorCores busy), minimal pad waste --
        b_pad8 = _round_up(B, _SUBLANE)
        num_tiles = max(pl.cdiv(b_pad8, _MAX_TILE_B), 1)
        if b_pad8 >= 2 * _SUBLANE:
            num_tiles = max(num_tiles, 2)
        tile_b = _round_up(pl.cdiv(b_pad8, num_tiles), _SUBLANE)
        b_pad = tile_b * num_tiles

        # input: cast to bf16 (halves read traffic); pad ONLY the batch axis
        # (feature dim stays at the true width -> no feature-pad pass).
        xc = x.astype(self.compute_dtype)
        if b_pad != B:
            xc = jnp.zeros((b_pad, Din), self.compute_dtype).at[:B].set(xc)

        def const_spec(shape):
            # weights / codebook: constant block index -> resident in VMEM
            return pl.BlockSpec(shape, lambda i: (0, 0))

        weight_args, weight_specs = [], []
        for w, b in self.enc:
            weight_args += [w, b]
            weight_specs += [const_spec(w.shape), const_spec(b.shape)]
        weight_args += [self.embedding, self.embedding_t, self.emb_sqnorm]
        weight_specs += [const_spec(self.embedding.shape),
                         const_spec(self.embedding_t.shape),
                         const_spec(self.emb_sqnorm.shape)]
        for w, b in self.dec:
            weight_args += [w, b]
            weight_specs += [const_spec(w.shape), const_spec(b.shape)]

        kernel = functools.partial(
            _fused_vqvae_kernel,
            n_enc=self.n_enc, n_dec=self.n_dec,
            k_true=self.num_embeddings, b_true=B,
            compute_dtype=self.compute_dtype)

        recon_p, sqerr_p = pl.pallas_call(
            kernel,
            out_shape=(
                jax.ShapeDtypeStruct((b_pad, d_out_pad), jnp.float32),
                jax.ShapeDtypeStruct((num_tiles, dz_pad), jnp.float32),
            ),
            grid_spec=pltpu.PrefetchScalarGridSpec(
                num_scalar_prefetch=0,
                grid=(num_tiles,),
                in_specs=[pl.BlockSpec((tile_b, Din), lambda i: (i, 0))]
                         + weight_specs,
                out_specs=(
                    pl.BlockSpec((tile_b, d_out_pad), lambda i: (i, 0)),
                    pl.BlockSpec((1, dz_pad), lambda i: (i, 0)),
                ),
            ),
            compiler_params=pltpu.CompilerParams(
                dimension_semantics=("parallel",),
                vmem_limit_bytes=_VMEM_LIMIT),
        )(xc, *weight_args)

        # loss = beta * mean((codeword - z)^2) over the true (B, Dz) elements.
        # Per-tile rows are already batch-masked; padded Dz lanes are exactly 0.
        loss = self.beta * jnp.sum(sqerr_p) / float(B * self.embedding_dim)
        recon = recon_p[:B, :Din]
        return recon, loss

    def __call__(self, x):
        return self._forward(x)


# ----------------------------------------------------------------------------
if __name__ == "__main__":
    key = jax.random.PRNGKey(0)
    k_param, k_x = jax.random.split(key)

    in_features = 16
    hidden_sizes = "32,8"
    latent_dim = 16        # num_embeddings K
    beta = 0.25
    batch = 4

    model = VQVAEPallas(in_features, hidden_sizes, latent_dim, beta, k_param)
    x = jax.random.uniform(k_x, (batch, in_features), jnp.float32)

    reconstructed, loss = model(x)
    jax.block_until_ready((reconstructed, loss))

    assert reconstructed.shape == (batch, in_features)
    assert loss.shape == ()
    assert bool(jnp.all(jnp.isfinite(reconstructed)))
    assert bool(jnp.isfinite(loss))
    print("KERNEL_OK")
</pallas_src>

<mosaic_0001>
module attributes {stable_mosaic.version = 11 : i64} {
  func.func @_fused_vqvae_kernel(%arg0: i32, %arg1: memref<8x16xbf16, #tpu.memory_space<vmem>>, %arg2: memref<16x128xbf16, #tpu.memory_space<vmem>>, %arg3: memref<1x128xf32, #tpu.memory_space<vmem>>, %arg4: memref<128x128xbf16, #tpu.memory_space<vmem>>, %arg5: memref<1x128xf32, #tpu.memory_space<vmem>>, %arg6: memref<128x128xbf16, #tpu.memory_space<vmem>>, %arg7: memref<128x128xbf16, #tpu.memory_space<vmem>>, %arg8: memref<1x128xf32, #tpu.memory_space<vmem>>, %arg9: memref<128x128xbf16, #tpu.memory_space<vmem>>, %arg10: memref<1x128xf32, #tpu.memory_space<vmem>>, %arg11: memref<128x128xbf16, #tpu.memory_space<vmem>>, %arg12: memref<1x128xf32, #tpu.memory_space<vmem>>, %arg13: memref<8x128xf32, #tpu.memory_space<vmem>>, %arg14: memref<1x128xf32, #tpu.memory_space<vmem>>) attributes {dimension_semantics = [#tpu.dimension_semantics<parallel>], iteration_bounds = array<i64: 1>, scalar_prefetch = 0 : i64, scratch_operands = 0 : i64, tpu.core_type = #tpu.core_type<tc>, window_params = [{transform_indices = @transform_0, window_bounds = array<i64: 8, 16>}, {pipeline_mode = #tpu.pipeline_mode<synchronous>, transform_indices = @transform_1, window_bounds = array<i64: 16, 128>}, {pipeline_mode = #tpu.pipeline_mode<synchronous>, transform_indices = @transform_2, window_bounds = array<i64: 1, 128>}, {pipeline_mode = #tpu.pipeline_mode<synchronous>, transform_indices = @transform_3, window_bounds = array<i64: 128, 128>}, {pipeline_mode = #tpu.pipeline_mode<synchronous>, transform_indices = @transform_4, window_bounds = array<i64: 1, 128>}, {pipeline_mode = #tpu.pipeline_mode<synchronous>, transform_indices = @transform_5, window_bounds = array<i64: 128, 128>}, {pipeline_mode = #tpu.pipeline_mode<synchronous>, transform_indices = @transform_6, window_bounds = array<i64: 128, 128>}, {pipeline_mode = #tpu.pipeline_mode<synchronous>, transform_indices = @transform_7, window_bounds = array<i64: 1, 128>}, {pipeline_mode = #tpu.pipeline_mode<synchronous>, transform_indices = @transform_8, window_bounds = array<i64: 128, 128>}, {pipeline_mode = #tpu.pipeline_mode<synchronous>, transform_indices = @transform_9, window_bounds = array<i64: 1, 128>}, {pipeline_mode = #tpu.pipeline_mode<synchronous>, transform_indices = @transform_10, window_bounds = array<i64: 128, 128>}, {pipeline_mode = #tpu.pipeline_mode<synchronous>, transform_indices = @transform_11, window_bounds = array<i64: 1, 128>}, {transform_indices = @transform_12, window_bounds = array<i64: 8, 128>}, {transform_indices = @transform_13, window_bounds = array<i64: 1, 128>}]} {
    %c0 = arith.constant 0 : index
    %c0_0 = arith.constant 0 : index
    %0 = vector.load %arg1[%c0, %c0_0] : memref<8x16xbf16, #tpu.memory_space<vmem>>, vector<8x16xbf16>
    %c0_1 = arith.constant 0 : index
    %c0_2 = arith.constant 0 : index
    %1 = vector.load %arg2[%c0_1, %c0_2] : memref<16x128xbf16, #tpu.memory_space<vmem>>, vector<16x128xbf16>
    %cst = arith.constant dense<0.000000e+00> : vector<8x128xf32>
    %2 = tpu.matmul %0, %1, %cst {dimension_numbers = #tpu.dot_dimension_numbers<[1], [0], [0], [1], [0, 0, 1, 1], [], []>} : vector<8x16xbf16>, vector<16x128xbf16>, vector<8x128xf32> -> vector<8x128xf32>
    %c0_3 = arith.constant 0 : index
    %c0_4 = arith.constant 0 : index
    %3 = vector.load %arg3[%c0_3, %c0_4] : memref<1x128xf32, #tpu.memory_space<vmem>>, vector<1x128xf32>
    %4 = vector.broadcast %3 : vector<1x128xf32> to vector<8x128xf32>
    %5 = arith.addf %2, %4 : vector<8x128xf32>
    %cst_5 = arith.constant 0.000000e+00 : f32
    %6 = vector.broadcast %cst_5 : f32 to vector<8x128xf32>
    %7 = arith.maximumf %5, %6 : vector<8x128xf32>
    %8 = arith.truncf %7 : vector<8x128xf32> to vector<8x128xbf16>
    %c0_6 = arith.constant 0 : index
    %c0_7 = arith.constant 0 : index
    %9 = vector.load %arg4[%c0_6, %c0_7] : memref<128x128xbf16, #tpu.memory_space<vmem>>, vector<128x128xbf16>
    %cst_8 = arith.constant dense<0.000000e+00> : vector<8x128xf32>
    %10 = tpu.matmul %8, %9, %cst_8 {dimension_numbers = #tpu.dot_dimension_numbers<[1], [0], [0], [1], [0, 0, 1, 1], [], []>} : vector<8x128xbf16>, vector<128x128xbf16>, vector<8x128xf32> -> vector<8x128xf32>
    %c0_9 = arith.constant 0 : index
    %c0_10 = arith.constant 0 : index
    %11 = vector.load %arg5[%c0_9, %c0_10] : memref<1x128xf32, #tpu.memory_space<vmem>>, vector<1x128xf32>
    %12 = vector.broadcast %11 : vector<1x128xf32> to vector<8x128xf32>
    %13 = arith.addf %10, %12 : vector<8x128xf32>
    %14 = arith.truncf %13 : vector<8x128xf32> to vector<8x128xbf16>
    %c0_11 = arith.constant 0 : index
    %c0_12 = arith.constant 0 : index
    %15 = vector.load %arg7[%c0_11, %c0_12] : memref<128x128xbf16, #tpu.memory_space<vmem>>, vector<128x128xbf16>
    %cst_13 = arith.constant dense<0.000000e+00> : vector<8x128xf32>
    %16 = tpu.matmul %14, %15, %cst_13 {dimension_numbers = #tpu.dot_dimension_numbers<[1], [0], [0], [1], [0, 0, 1, 1], [], []>} : vector<8x128xbf16>, vector<128x128xbf16>, vector<8x128xf32> -> vector<8x128xf32>
    %c0_14 = arith.constant 0 : index
    %c0_15 = arith.constant 0 : index
    %17 = vector.load %arg8[%c0_14, %c0_15] : memref<1x128xf32, #tpu.memory_space<vmem>>, vector<1x128xf32>
    %cst_16 = arith.constant 2.000000e+00 : f32
    %18 = vector.broadcast %cst_16 : f32 to vector<8x128xf32>
    %19 = arith.mulf %18, %16 : vector<8x128xf32>
    %20 = vector.broadcast %17 : vector<1x128xf32> to vector<8x128xf32>
    %21 = arith.subf %20, %19 : vector<8x128xf32>
    %22 = tpu.iota {dimensions = array<i32: 1>} : vector<8x128xi32>
    %c16_i32 = arith.constant 16 : i32
    %23 = vector.broadcast %c16_i32 : i32 to vector<8x128xi32>
    %24 = arith.cmpi slt, %22, %23 : vector<8x128xi32>
    %cst_17 = arith.constant 0x7F800000 : f32
    %25 = vector.broadcast %cst_17 : f32 to vector<8x128xf32>
    %26 = arith.select %24, %21, %25 : vector<8x128xi1>, vector<8x128xf32>
    %cst_18 = arith.constant dense<0x7F800000> : vector<8xf32>
    %27 = vector.multi_reduction <minimumf>, %26, %cst_18 [1] : vector<8x128xf32> to vector<8xf32>
    %28 = vector.shape_cast %27 : vector<8xf32> to vector<8x1xf32>
    %29 = vector.broadcast %28 : vector<8x1xf32> to vector<8x128xf32>
    %30 = arith.cmpf ole, %26, %29 : vector<8x128xf32>
    %c128_i32 = arith.constant 128 : i32
    %31 = vector.broadcast %c128_i32 : i32 to vector<8x128xi32>
    %32 = arith.select %30, %22, %31 : vector<8x128xi1>, vector<8x128xi32>
    %cst_19 = arith.constant dense<2147483647> : vector<8xi32>
    %33 = vector.multi_reduction <minsi>, %32, %cst_19 [1] : vector<8x128xi32> to vector<8xi32>
    %34 = vector.shape_cast %33 : vector<8xi32> to vector<8x1xi32>
    %35 = vector.broadcast %34 : vector<8x1xi32> to vector<8x128xi32>
    %36 = arith.cmpi eq, %22, %35 : vector<8x128xi32>
    %37 = arith.extui %36 : vector<8x128xi1> to vector<8x128xi32>
    %38 = arith.sitofp %37 : vector<8x128xi32> to vector<8x128xf32>
    %39 = arith.truncf %38 : vector<8x128xf32> to vector<8x128xbf16>
    %c0_20 = arith.constant 0 : index
    %c0_21 = arith.constant 0 : index
    %40 = vector.load %arg6[%c0_20, %c0_21] : memref<128x128xbf16, #tpu.memory_space<vmem>>, vector<128x128xbf16>
    %cst_22 = arith.constant dense<0.000000e+00> : vector<8x128xf32>
    %41 = tpu.matmul %39, %40, %cst_22 {dimension_numbers = #tpu.dot_dimension_numbers<[1], [0], [0], [1], [0, 0, 1, 1], [], []>} : vector<8x128xbf16>, vector<128x128xbf16>, vector<8x128xf32> -> vector<8x128xf32>
    %42 = arith.subf %41, %13 : vector<8x128xf32>
    %c8_i32 = arith.constant 8 : i32
    %43 = arith.muli %arg0, %c8_i32 : i32
    %44 = tpu.iota {dimensions = array<i32: 0>} : vector<8x128xi32>
    %45 = vector.broadcast %43 : i32 to vector<8x128xi32>
    %46 = arith.addi %45, %44 : vector<8x128xi32>
    %c4_i32 = arith.constant 4 : i32
    %47 = vector.broadcast %c4_i32 : i32 to vector<8x128xi32>
    %48 = arith.cmpi slt, %46, %47 : vector<8x128xi32>
    %49 = arith.mulf %42, %42 : vector<8x128xf32>
    %cst_23 = arith.constant 0.000000e+00 : f32
    %50 = vector.broadcast %cst_23 : f32 to vector<8x128xf32>
    %51 = arith.select %48, %49, %50 : vector<8x128xi1>, vector<8x128xf32>
    %cst_24 = arith.constant dense<0.000000e+00> : vector<128xf32>
    %52 = vector.multi_reduction <add>, %51, %cst_24 [0] : vector<8x128xf32> to vector<128xf32>
    %53 = vector.shape_cast %52 : vector<128xf32> to vector<1x128xf32>
    %c0_25 = arith.constant 0 : index
    %c0_26 = arith.constant 0 : index
    %54 = vector.load %arg14[%c0_25, %c0_26] : memref<1x128xf32, #tpu.memory_space<vmem>>, vector<1x128xf32>
    tpu.vector_store %arg14[%c0_25, %c0_26], %53 {strides = array<i32>} : memref<1x128xf32, #tpu.memory_space<vmem>>, vector<1x128xf32>,
    %55 = arith.truncf %41 : vector<8x128xf32> to vector<8x128xbf16>
    %c0_27 = arith.constant 0 : index
    %c0_28 = arith.constant 0 : index
    %56 = vector.load %arg9[%c0_27, %c0_28] : memref<128x128xbf16, #tpu.memory_space<vmem>>, vector<128x128xbf16>
    %cst_29 = arith.constant dense<0.000000e+00> : vector<8x128xf32>
    %57 = tpu.matmul %55, %56, %cst_29 {dimension_numbers = #tpu.dot_dimension_numbers<[1], [0], [0], [1], [0, 0, 1, 1], [], []>} : vector<8x128xbf16>, vector<128x128xbf16>, vector<8x128xf32> -> vector<8x128xf32>
    %c0_30 = arith.constant 0 : index
    %c0_31 = arith.constant 0 : index
    %58 = vector.load %arg10[%c0_30, %c0_31] : memref<1x128xf32, #tpu.memory_space<vmem>>, vector<1x128xf32>
    %59 = vector.broadcast %58 : vector<1x128xf32> to vector<8x128xf32>
    %60 = arith.addf %57, %59 : vector<8x128xf32>
    %cst_32 = arith.constant 0.000000e+00 : f32
    %61 = vector.broadcast %cst_32 : f32 to vector<8x128xf32>
    %62 = arith.maximumf %60, %61 : vector<8x128xf32>
    %63 = arith.truncf %62 : vector<8x128xf32> to vector<8x128xbf16>
    %c0_33 = arith.constant 0 : index
    %c0_34 = arith.constant 0 : index
    %64 = vector.load %arg11[%c0_33, %c0_34] : memref<128x128xbf16, #tpu.memory_space<vmem>>, vector<128x128xbf16>
    %cst_35 = arith.constant dense<0.000000e+00> : vector<8x128xf32>
    %65 = tpu.matmul %63, %64, %cst_35 {dimension_numbers = #tpu.dot_dimension_numbers<[1], [0], [0], [1], [0, 0, 1, 1], [], []>} : vector<8x128xbf16>, vector<128x128xbf16>, vector<8x128xf32> -> vector<8x128xf32>
    %c0_36 = arith.constant 0 : index
    %c0_37 = arith.constant 0 : index
    %66 = vector.load %arg12[%c0_36, %c0_37] : memref<1x128xf32, #tpu.memory_space<vmem>>, vector<1x128xf32>
    %67 = vector.broadcast %66 : vector<1x128xf32> to vector<8x128xf32>
    %68 = arith.addf %65, %67 : vector<8x128xf32>
    %cst_38 = arith.constant 0.000000e+00 : f32
    %69 = vector.broadcast %cst_38 : f32 to vector<8x128xf32>
    %70 = arith.subf %69, %68 : vector<8x128xf32>
    %71 = math.exp %70 : vector<8x128xf32>
    %cst_39 = arith.constant 1.000000e+00 : f32
    %72 = vector.broadcast %cst_39 : f32 to vector<8x128xf32>
    %73 = arith.addf %72, %71 : vector<8x128xf32>
    %74 = tpu.reciprocal %73 {approx = true} : vector<8x128xf32> -> vector<8x128xf32>
    %c0_40 = arith.constant 0 : index
    %c0_41 = arith.constant 0 : index
    %75 = vector.load %arg13[%c0_40, %c0_41] : memref<8x128xf32, #tpu.memory_space<vmem>>, vector<8x128xf32>
    tpu.vector_store %arg13[%c0_40, %c0_41], %74 {strides = array<i32>} : memref<8x128xf32, #tpu.memory_space<vmem>>, vector<8x128xf32>,
    return
  }
  func.func @transform_0(%arg0: i32) -> (i32, i32) {
    %c0_i32 = arith.constant 0 : i32
    %c0_i32_0 = arith.constant 0 : i32
    return %arg0, %c0_i32 : i32, i32
  }
  func.func @transform_1(%arg0: i32) -> (i32, i32) {
    %c0_i32 = arith.constant 0 : i32
    %c0_i32_0 = arith.constant 0 : i32
    %c0_i32_1 = arith.constant 0 : i32
    return %c0_i32, %c0_i32_0 : i32, i32
  }
  func.func @transform_2(%arg0: i32) -> (i32, i32) {
    %c0_i32 = arith.constant 0 : i32
    %c0_i32_0 = arith.constant 0 : i32
    %c0_i32_1 = arith.constant 0 : i32
    return %c0_i32, %c0_i32_0 : i32, i32
  }
  func.func @transform_3(%arg0: i32) -> (i32, i32) {
    %c0_i32 = arith.constant 0 : i32
    %c0_i32_0 = arith.constant 0 : i32
    %c0_i32_1 = arith.constant 0 : i32
    return %c0_i32, %c0_i32_0 : i32, i32
  }
  func.func @transform_4(%arg0: i32) -> (i32, i32) {
    %c0_i32 = arith.constant 0 : i32
    %c0_i32_0 = arith.constant 0 : i32
    %c0_i32_1 = arith.constant 0 : i32
    return %c0_i32, %c0_i32_0 : i32, i32
  }
  func.func @transform_5(%arg0: i32) -> (i32, i32) {
    %c0_i32 = arith.constant 0 : i32
    %c0_i32_0 = arith.constant 0 : i32
    %c0_i32_1 = arith.constant 0 : i32
    return %c0_i32, %c0_i32_0 : i32, i32
  }
  func.func @transform_6(%arg0: i32) -> (i32, i32) {
    %c0_i32 = arith.constant 0 : i32
    %c0_i32_0 = arith.constant 0 : i32
    %c0_i32_1 = arith.constant 0 : i32
    return %c0_i32, %c0_i32_0 : i32, i32
  }
  func.func @transform_7(%arg0: i32) -> (i32, i32) {
    %c0_i32 = arith.constant 0 : i32
    %c0_i32_0 = arith.constant 0 : i32
    %c0_i32_1 = arith.constant 0 : i32
    return %c0_i32, %c0_i32_0 : i32, i32
  }
  func.func @transform_8(%arg0: i32) -> (i32, i32) {
    %c0_i32 = arith.constant 0 : i32
    %c0_i32_0 = arith.constant 0 : i32
    %c0_i32_1 = arith.constant 0 : i32
    return %c0_i32, %c0_i32_0 : i32, i32
  }
  func.func @transform_9(%arg0: i32) -> (i32, i32) {
    %c0_i32 = arith.constant 0 : i32
    %c0_i32_0 = arith.constant 0 : i32
    %c0_i32_1 = arith.constant 0 : i32
    return %c0_i32, %c0_i32_0 : i32, i32
  }
  func.func @transform_10(%arg0: i32) -> (i32, i32) {
    %c0_i32 = arith.constant 0 : i32
    %c0_i32_0 = arith.constant 0 : i32
    %c0_i32_1 = arith.constant 0 : i32
    return %c0_i32, %c0_i32_0 : i32, i32
  }
  func.func @transform_11(%arg0: i32) -> (i32, i32) {
    %c0_i32 = arith.constant 0 : i32
    %c0_i32_0 = arith.constant 0 : i32
    %c0_i32_1 = arith.constant 0 : i32
    return %c0_i32, %c0_i32_0 : i32, i32
  }
  func.func @transform_12(%arg0: i32) -> (i32, i32) {
    %c0_i32 = arith.constant 0 : i32
    %c0_i32_0 = arith.constant 0 : i32
    return %arg0, %c0_i32 : i32, i32
  }
  func.func @transform_13(%arg0: i32) -> (i32, i32) {
    %c0_i32 = arith.constant 0 : i32
    %c0_i32_0 = arith.constant 0 : i32
    return %arg0, %c0_i32 : i32, i32
  }
}

</mosaic_0001>

<llo_original>
// kernel: _forward_impl.1
$region0: #{_forward_impl.1}
  #allocation0 [shape = 'u32[]', space=smem, size = 0x4, offset = 0x4, fixed_abs, tag = 'smem constant byte address 0x4 - core index']
  #allocation1 [shape = 'u32[72,128]{1,0:T(1,128)}', space=vmem, size = 0x9000, scoped, tag = 'internal scratch']
  %s0 = inlined_call_operand.vmem [shape: bf16[8,16], index: 0, kind: input, shape index: {}]
  %s1 = inlined_call_operand.vmem [shape: bf16[16,128], index: 1, kind: input, shape index: {}]
  %s2 = inlined_call_operand.vmem [shape: f32[1,128], index: 2, kind: input, shape index: {}]
  %s3 = inlined_call_operand.hbm [shape: bf16[128,128], index: 3, kind: input, shape index: {}]
  %s4 = inlined_call_operand.vmem [shape: f32[1,128], index: 4, kind: input, shape index: {}]
  %s5 = inlined_call_operand.hbm [shape: bf16[128,128], index: 5, kind: input, shape index: {}]
  %s6 = inlined_call_operand.hbm [shape: bf16[128,128], index: 6, kind: input, shape index: {}]
  %s7 = inlined_call_operand.vmem [shape: f32[1,128], index: 7, kind: input, shape index: {}]
  %s8 = inlined_call_operand.hbm [shape: bf16[128,128], index: 8, kind: input, shape index: {}]
  %s9 = inlined_call_operand.vmem [shape: f32[1,128], index: 9, kind: input, shape index: {}]
  %s10 = inlined_call_operand.hbm [shape: bf16[128,128], index: 10, kind: input, shape index: {}]
  %s11 = inlined_call_operand.vmem [shape: f32[1,128], index: 11, kind: input, shape index: {}]
  %s12 = inlined_call_operand.vmem [shape: f32[8,128], index: 12, kind: output, shape index: {0}]
  %s13 = inlined_call_operand.vmem [shape: f32[1,128], index: 13, kind: output, shape index: {1}]
  %14 = xla_tuple %s12, %s13
  %s15 = sld [smem:[#allocation0]]
  $region86: #{_forward_impl.1} parent=0
    _
  %s17 = ssub.s32 1, %s15
  %s18 = scalar_select 0, %s17, %s15
  $region1: #{_forward_impl.1} parent=0
    #allocation2 [shape = 'u8[32768]{0}', space=vmem, size = 0x8000, scoped, tag = 'input window, operand 3, single buffered']
    #allocation3 [shape = 's32[1]{0}', space=sflag, size = 0x4, scoped, tag = 'scoped memory for _forward_impl.1']
    #allocation4 [shape = 'u8[32768]{0}', space=vmem, size = 0x8000, scoped, tag = 'input window, operand 5, single buffered']
    #allocation5 [shape = 's32[1]{0}', space=sflag, size = 0x4, scoped, tag = 'scoped memory for _forward_impl.1']
    #allocation6 [shape = 'u8[32768]{0}', space=vmem, size = 0x8000, scoped, tag = 'input window, operand 6, single buffered']
    #allocation7 [shape = 'u8[32768]{0}', space=vmem, size = 0x8000, scoped, tag = 'input window, operand 8, single buffered']
    #allocation8 [shape = 's32[1]{0}', space=sflag, size = 0x4, scoped, tag = 'scoped memory for _forward_impl.1']
    #allocation9 [shape = 'u8[32768]{0}', space=vmem, size = 0x8000, scoped, tag = 'input window, operand 10, single buffered']
    %19 = vsyncpa [#allocation3], 0
    %20 = vsyncpa [#allocation5], 0
    %21 = vsyncpa [#allocation8], 0
    // Predicated region
    $region2: #{_forward_impl.1} parent=1 // pred_check
      _
    $region3: #{_forward_impl.1} parent=1 // pred_check_branch
      %23 = sbr.rel (0) target = $region5
    $region4: #{_forward_impl.1} parent=1 // pred_region
      _
    $region5: #{_forward_impl.1} parent=1 // pred_fallthru
      _
    // Predicated region
    $region6: #{_forward_impl.1} parent=1 // pred_check
      _
    $region7: #{_forward_impl.1} parent=1 // pred_check_branch
      %25 = sbr.rel (0) target = $region9
    $region8: #{_forward_impl.1} parent=1 // pred_region
      _
    $region9: #{_forward_impl.1} parent=1 // pred_fallthru
      _
    // Predicated region
    $region10: #{_forward_impl.1} parent=1 // pred_check
      _
    $region11: #{_forward_impl.1} parent=1 // pred_check_branch
      %27 = sbr.rel (0) target = $region13
    $region12: #{_forward_impl.1} parent=1 // pred_region
      _
    $region13: #{_forward_impl.1} parent=1 // pred_fallthru
      _
    // Predicated region
    $region14: #{_forward_impl.1} parent=1 // pred_check
      _
    $region15: #{_forward_impl.1} parent=1 // pred_check_branch
      %29 = sbr.rel (0) target = $region17
    $region16: #{_forward_impl.1} parent=1 // pred_region
      %31 = vsyncadd [#allocation3], 0
      %s32 = sshll.u32 %s3, 4
      %s33 = int_to_ptr.hbm [resolvable:$true] %s32
      %s34 = sshll.u32 [#allocation2], 4
      %s35 = int_to_ptr.vmem [resolvable:$true] %s34
      %40 = dma.hbm_to_vmem [thread:$0]  %s33, 1024, %s35, [#allocation3], 64, 64, 4
    $region17: #{_forward_impl.1} parent=1 // pred_fallthru
      _
    // Predicated region
    $region18: #{_forward_impl.1} parent=1 // pred_check
      _
    $region19: #{_forward_impl.1} parent=1 // pred_check_branch
      %42 = sbr.rel (0) target = $region21
    $region20: #{_forward_impl.1} parent=1 // pred_region
      _
    $region21: #{_forward_impl.1} parent=1 // pred_fallthru
      _
    // Predicated region
    $region22: #{_forward_impl.1} parent=1 // pred_check
      _
    $region23: #{_forward_impl.1} parent=1 // pred_check_branch
      %44 = sbr.rel (0) target = $region25
    $region24: #{_forward_impl.1} parent=1 // pred_region
      %46 = vsyncadd [#allocation5], 0
      %s47 = sshll.u32 %s5, 4
      %s48 = int_to_ptr.hbm [resolvable:$true] %s47
      %s49 = sshll.u32 [#allocation4], 4
      %s50 = int_to_ptr.vmem [resolvable:$true] %s49
      %55 = dma.hbm_to_vmem [thread:$0]  %s48, 1024, %s50, [#allocation5], 64, 64, 4
    $region25: #{_forward_impl.1} parent=1 // pred_fallthru
      _
    // Predicated region
    $region26: #{_forward_impl.1} parent=1 // pred_check
      _
    $region27: #{_forward_impl.1} parent=1 // pred_check_branch
      %57 = sbr.rel (0) target = $region29
    $region28: #{_forward_impl.1} parent=1 // pred_region
      %59 = vsyncadd [#allocation5], 0
      %s60 = sshll.u32 %s6, 4
      %s61 = int_to_ptr.hbm [resolvable:$true] %s60
      %s62 = sshll.u32 [#allocation6], 4
      %s63 = int_to_ptr.vmem [resolvable:$true] %s62
      %68 = dma.hbm_to_vmem [thread:$0]  %s61, 1024, %s63, [#allocation5], 64, 64, 4
    $region29: #{_forward_impl.1} parent=1 // pred_fallthru
      _
    // Predicated region
    $region30: #{_forward_impl.1} parent=1 // pred_check
      _
    $region31: #{_forward_impl.1} parent=1 // pred_check_branch
      %70 = sbr.rel (0) target = $region33
    $region32: #{_forward_impl.1} parent=1 // pred_region
      _
    $region33: #{_forward_impl.1} parent=1 // pred_fallthru
      _
    // Predicated region
    $region34: #{_forward_impl.1} parent=1 // pred_check
      _
    $region35: #{_forward_impl.1} parent=1 // pred_check_branch
      %72 = sbr.rel (0) target = $region37
    $region36: #{_forward_impl.1} parent=1 // pred_region
      %74 = vsyncadd [#allocation8], 0
      %s75 = sshll.u32 %s8, 4
      %s76 = int_to_ptr.hbm [resolvable:$true] %s75
      %s77 = sshll.u32 [#allocation7], 4
      %s78 = int_to_ptr.vmem [resolvable:$true] %s77
      %83 = dma.hbm_to_vmem [thread:$0]  %s76, 1024, %s78, [#allocation8], 64, 64, 4
    $region37: #{_forward_impl.1} parent=1 // pred_fallthru
      _
    // Predicated region
    $region38: #{_forward_impl.1} parent=1 // pred_check
      _
    $region39: #{_forward_impl.1} parent=1 // pred_check_branch
      %85 = sbr.rel (0) target = $region41
    $region40: #{_forward_impl.1} parent=1 // pred_region
      _
    $region41: #{_forward_impl.1} parent=1 // pred_fallthru
      _
    // Predicated region
    $region42: #{_forward_impl.1} parent=1 // pred_check
      _
    $region43: #{_forward_impl.1} parent=1 // pred_check_branch
      %87 = sbr.rel (0) target = $region45
    $region44: #{_forward_impl.1} parent=1 // pred_region
      %89 = vsyncadd [#allocation8], 0
      %s90 = sshll.u32 %s10, 4
      %s91 = int_to_ptr.hbm [resolvable:$true] %s90
      %s92 = sshll.u32 [#allocation9], 4
      %s93 = int_to_ptr.vmem [resolvable:$true] %s92
      %98 = dma.hbm_to_vmem [thread:$0]  %s91, 1024, %s93, [#allocation8], 64, 64, 4
    $region45: #{_forward_impl.1} parent=1 // pred_fallthru
      _
    // Predicated region
    $region46: #{_forward_impl.1} parent=1 // pred_check
      _
    $region47: #{_forward_impl.1} parent=1 // pred_check_branch
      %100 = sbr.rel (0) target = $region49
    $region48: #{_forward_impl.1} parent=1 // pred_region
      _
    $region49: #{_forward_impl.1} parent=1 // pred_fallthru
      _
    // Predicated region
    $region50: #{_forward_impl.1} parent=1 // pred_check
      _
    $region51: #{_forward_impl.1} parent=1 // pred_check_branch
      %102 = sbr.rel (0) target = $region53
    $region52: #{_forward_impl.1} parent=1 // pred_region
      %104 = dma.done [#allocation3], 1024
    $region53: #{_forward_impl.1} parent=1 // pred_fallthru
      _
    // Predicated region
    $region54: #{_forward_impl.1} parent=1 // pred_check
      _
    $region55: #{_forward_impl.1} parent=1 // pred_check_branch
      %106 = sbr.rel (0) target = $region57
    $region56: #{_forward_impl.1} parent=1 // pred_region
      %108 = dma.done [#allocation5], 1024
    $region57: #{_forward_impl.1} parent=1 // pred_fallthru
      _
    // Predicated region
    $region58: #{_forward_impl.1} parent=1 // pred_check
      _
    $region59: #{_forward_impl.1} parent=1 // pred_check_branch
      %110 = sbr.rel (0) target = $region61
    $region60: #{_forward_impl.1} parent=1 // pred_region
      %112 = dma.done [#allocation5], 1024
    $region61: #{_forward_impl.1} parent=1 // pred_fallthru
      _
    // Predicated region
    $region62: #{_forward_impl.1} parent=1 // pred_check
      _
    $region63: #{_forward_impl.1} parent=1 // pred_check_branch
      %114 = sbr.rel (0) target = $region65
    $region64: #{_forward_impl.1} parent=1 // pred_region
      %116 = dma.done [#allocation8], 1024
    $region65: #{_forward_impl.1} parent=1 // pred_fallthru
      _
    // Predicated region
    $region66: #{_forward_impl.1} parent=1 // pred_check
      _
    $region67: #{_forward_impl.1} parent=1 // pred_check_branch
      %118 = sbr.rel (0) target = $region69
    $region68: #{_forward_impl.1} parent=1 // pred_region
      %120 = dma.done [#allocation8], 1024
    $region69: #{_forward_impl.1} parent=1 // pred_fallthru
      _
    %v122 = vld [vmem:[%s0] sm:$0xf]
    %v123 = vld [vmem:[%s1] sm:$0xf]
    %v124 = vld [vmem:[%s1 + $0x4] sm:$0xf]
    %v125 = vld [vmem:[%s2] sm:$0x1]
    %v127 = vperm.slane %v125, 0
    %v131 = vunpack.c.l.b16 %v123
    %v132 = vunpack.c.l.b16 %v124
    %v133 = vpack.c.b16 %v132, %v131
    %vm135 = vcmask 130048
    %v137 = vsel %vm135, %v122, 0
    %139 = vmatpush.bf16.msra.mxu0 0
    %140 = vmatpush.bf16.msra.mxu0 0
    %141 = vmatpush.bf16.msra.mxu0 0
    %142 = vmatpush.bf16.msra.mxu0 0
    %143 = vmatpush.bf16.msra.mxu0 0
    %144 = vmatpush.bf16.msra.mxu0 0
    %145 = vmatpush.bf16.msra.mxu0 0
    %146 = vmatpush.bf16.msra.mxu0 %v133
    %147 = vmatmul.bf16.gmra.mxu0 %v137
    %v148 = vpop.f32.mrf.mxu0
    %v149 = vadd.f32 %v127, %v148
    %v150 = vpop.f32.mrf.mxu0
    %151 = vdwg.mxu0
    %v152 = vmax.f32 %v149, 0.0
    %v153 = vpack.c.bf16 %v152, %v152
    %v154 = vld [vmem:[#allocation2] sm:$0xf]
    %v155 = vld [vmem:[#allocation2 + $0x4] sm:$0xf]
    %v156 = vld [vmem:[#allocation2 + $0x8] sm:$0xf]
    %v157 = vld [vmem:[#allocation2 + $0xc] sm:$0xf]
    %v158 = vld [vmem:[#allocation2 + $0x10] sm:$0xf]
    %v159 = vld [vmem:[#allocation2 + $0x14] sm:$0xf]
    %v160 = vld [vmem:[#allocation2 + $0x18] sm:$0xf]
    %v161 = vld [vmem:[#allocation2 + $0x1c] sm:$0xf]
    %v162 = vld [vmem:[#allocation2 + $0x20] sm:$0xf]
    %v163 = vld [vmem:[#allocation2 + $0x24] sm:$0xf]
    %v164 = vld [vmem:[#allocation2 + $0x28] sm:$0xf]
    %v165 = vld [vmem:[#allocation2 + $0x2c] sm:$0xf]
    %v166 = vld [vmem:[#allocation2 + $0x30] sm:$0xf]
    %v167 = vld [vmem:[#allocation2 + $0x34] sm:$0xf]
    %v168 = vld [vmem:[#allocation2 + $0x38] sm:$0xf]
    %v169 = vld [vmem:[#allocation2 + $0x3c] sm:$0xf]
    %v170 = vld [vmem:[%s4] sm:$0x1]
    %v172 = vperm.slane %v170, 0
    %v190 = vunpack.c.l.b16 %v154
    %v191 = vunpack.c.l.b16 %v155
    %v192 = vunpack.c.l.b16 %v156
    %v193 = vunpack.c.l.b16 %v157
    %v194 = vunpack.c.l.b16 %v158
    %v195 = vunpack.c.l.b16 %v159
    %v196 = vunpack.c.l.b16 %v160
    %v197 = vunpack.c.l.b16 %v161
    %v198 = vunpack.c.l.b16 %v162
    %v199 = vunpack.c.l.b16 %v163
    %v200 = vunpack.c.l.b16 %v164
    %v201 = vunpack.c.l.b16 %v165
    %v202 = vunpack.c.l.b16 %v166
    %v203 = vunpack.c.l.b16 %v167
    %v204 = vunpack.c.l.b16 %v168
    %v205 = vunpack.c.l.b16 %v169
    %v206 = vpack.c.b16 %v191, %v190
    %v207 = vpack.c.b16 %v193, %v192
    %v208 = vpack.c.b16 %v195, %v194
    %v209 = vpack.c.b16 %v197, %v196
    %v210 = vpack.c.b16 %v199, %v198
    %v211 = vpack.c.b16 %v201, %v200
    %v212 = vpack.c.b16 %v203, %v202
    %v213 = vpack.c.b16 %v205, %v204
    %222 = vmatpush.bf16.msra.mxu0 %v213
    %223 = vmatpush.bf16.msra.mxu0 %v212
    %224 = vmatpush.bf16.msra.mxu0 %v211
    %225 = vmatpush.bf16.msra.mxu0 %v210
    %226 = vmatpush.bf16.msra.mxu0 %v209
    %227 = vmatpush.bf16.msra.mxu0 %v208
    %228 = vmatpush.bf16.msra.mxu0 %v207
    %229 = vmatpush.bf16.msra.mxu0 %v206
    %230 = vmatmul.bf16.gmra.mxu0 %v153
    %v231 = vpop.f32.mrf.mxu0
    %v232 = vadd.f32 %v172, %v231
    %v233 = vpop.f32.mrf.mxu0
    %234 = vdwg.mxu0
    %v235 = vpack.c.bf16 %v232, %v232
    %v236 = vld [vmem:[#allocation6] sm:$0xf]
    %v237 = vld [vmem:[#allocation6 + $0x4] sm:$0xf]
    %v238 = vld [vmem:[#allocation6 + $0x8] sm:$0xf]
    %v239 = vld [vmem:[#allocation6 + $0xc] sm:$0xf]
    %v240 = vld [vmem:[#allocation6 + $0x10] sm:$0xf]
    %v241 = vld [vmem:[#allocation6 + $0x14] sm:$0xf]
    %v242 = vld [vmem:[#allocation6 + $0x18] sm:$0xf]
    %v243 = vld [vmem:[#allocation6 + $0x1c] sm:$0xf]
    %v244 = vld [vmem:[#allocation6 + $0x20] sm:$0xf]
    %v245 = vld [vmem:[#allocation6 + $0x24] sm:$0xf]
    %v246 = vld [vmem:[#allocation6 + $0x28] sm:$0xf]
    %v247 = vld [vmem:[#allocation6 + $0x2c] sm:$0xf]
    %v248 = vld [vmem:[#allocation6 + $0x30] sm:$0xf]
    %v249 = vld [vmem:[#allocation6 + $0x34] sm:$0xf]
    %v250 = vld [vmem:[#allocation6 + $0x38] sm:$0xf]
    %v251 = vld [vmem:[#allocation6 + $0x3c] sm:$0xf]
    %v268 = vunpack.c.l.b16 %v236
    %v269 = vunpack.c.l.b16 %v237
    %v270 = vunpack.c.l.b16 %v238
    %v271 = vunpack.c.l.b16 %v239
    %v272 = vunpack.c.l.b16 %v240
    %v273 = vunpack.c.l.b16 %v241
    %v274 = vunpack.c.l.b16 %v242
    %v275 = vunpack.c.l.b16 %v243
    %v276 = vunpack.c.l.b16 %v244
    %v277 = vunpack.c.l.b16 %v245
    %v278 = vunpack.c.l.b16 %v246
    %v279 = vunpack.c.l.b16 %v247
    %v280 = vunpack.c.l.b16 %v248
    %v281 = vunpack.c.l.b16 %v249
    %v282 = vunpack.c.l.b16 %v250
    %v283 = vunpack.c.l.b16 %v251
    %v284 = vpack.c.b16 %v269, %v268
    %v285 = vpack.c.b16 %v271, %v270
    %v286 = vpack.c.b16 %v273, %v272
    %v287 = vpack.c.b16 %v275, %v274
    %v288 = vpack.c.b16 %v277, %v276
    %v289 = vpack.c.b16 %v279, %v278
    %v290 = vpack.c.b16 %v281, %v280
    %v291 = vpack.c.b16 %v283, %v282
    %300 = vmatpush.bf16.msra.mxu0 %v291
    %301 = vmatpush.bf16.msra.mxu0 %v290
    %302 = vmatpush.bf16.msra.mxu0 %v289
    %303 = vmatpush.bf16.msra.mxu0 %v288
    %304 = vmatpush.bf16.msra.mxu0 %v287
    %305 = vmatpush.bf16.msra.mxu0 %v286
    %306 = vmatpush.bf16.msra.mxu0 %v285
    %307 = vmatpush.bf16.msra.mxu0 %v284
    %308 = vmatmul.bf16.gmra.mxu0 %v235
    %v309 = vpop.f32.mrf.mxu0
    %v310 = vadd.f32 0.0, %v309
    %v311 = vpop.f32.mrf.mxu0
    %312 = vdwg.mxu0
    %v313 = vld [vmem:[%s7] sm:$0x1]
    %v314 = vmul.f32 %v310, 2.0
    %v316 = vperm.slane %v313, 0
    %v318 = vsub.f32 %v316, %v314
    %v319 = vlaneseq
    %v320 = vand.u32 %v319, 127
    %vm321 = vcmp.lt.s32.totalorder %v320, 16
    %v322 = vsel %vm321, %v318, inf
    %323 = vmin.xlane.f32.xlu0 %v322
    %v324 = vpop.xlane.xlu0 %323
    %vm325 = vcmp.le.f32.partialorder %v322, %v324
    %v326 = vsel %vm325, %v320, 128
    %v327 = vand.u32 %v326, 65535
    %v328 = vshra.s32 %v326, 16
    %v329 = vcvt.s32.f32 %v327
    %v330 = vcvt.s32.f32 %v328
    %331 = vmin.xlane.f32.xlu0 %v330
    %v332 = vpop.xlane.xlu0 %331
    %vm333 = vcmp.eq.f32.partialorder %v330, %v332
    %v334 = vsel %vm333, %v329, inf
    %335 = vmin.xlane.f32.xlu0 %v334
    %v336 = vpop.xlane.xlu0 %335
    %v337 = vcvt.f32.s32 %v336
    %v338 = vcvt.f32.s32 %v332
    %v339 = vshll.u32 %v338, 16
    %v340 = vadd.s32 %v339, %v337
    %vm341 = vcmp.eq.s32.totalorder %v320, %v340
    %v342 = vsel %vm341, 1, 0
    %v343 = vcvt.s32.f32 %v342
    %v344 = vpack.c.bf16 %v343, %v343
    %v345 = vld [vmem:[#allocation4] sm:$0xf]
    %v346 = vld [vmem:[#allocation4 + $0x4] sm:$0xf]
    %v347 = vld [vmem:[#allocation4 + $0x8] sm:$0xf]
    %v348 = vld [vmem:[#allocation4 + $0xc] sm:$0xf]
    %v349 = vld [vmem:[#allocation4 + $0x10] sm:$0xf]
    %v350 = vld [vmem:[#allocation4 + $0x14] sm:$0xf]
    %v351 = vld [vmem:[#allocation4 + $0x18] sm:$0xf]
    %v352 = vld [vmem:[#allocation4 + $0x1c] sm:$0xf]
    %v353 = vld [vmem:[#allocation4 + $0x20] sm:$0xf]
    %v354 = vld [vmem:[#allocation4 + $0x24] sm:$0xf]
    %v355 = vld [vmem:[#allocation4 + $0x28] sm:$0xf]
    %v356 = vld [vmem:[#allocation4 + $0x2c] sm:$0xf]
    %v357 = vld [vmem:[#allocation4 + $0x30] sm:$0xf]
    %v358 = vld [vmem:[#allocation4 + $0x34] sm:$0xf]
    %v359 = vld [vmem:[#allocation4 + $0x38] sm:$0xf]
    %v360 = vld [vmem:[#allocation4 + $0x3c] sm:$0xf]
    %v377 = vunpack.c.l.b16 %v345
    %v378 = vunpack.c.l.b16 %v346
    %v379 = vunpack.c.l.b16 %v347
    %v380 = vunpack.c.l.b16 %v348
    %v381 = vunpack.c.l.b16 %v349
    %v382 = vunpack.c.l.b16 %v350
    %v383 = vunpack.c.l.b16 %v351
    %v384 = vunpack.c.l.b16 %v352
    %v385 = vunpack.c.l.b16 %v353
    %v386 = vunpack.c.l.b16 %v354
    %v387 = vunpack.c.l.b16 %v355
    %v388 = vunpack.c.l.b16 %v356
    %v389 = vunpack.c.l.b16 %v357
    %v390 = vunpack.c.l.b16 %v358
    %v391 = vunpack.c.l.b16 %v359
    %v392 = vunpack.c.l.b16 %v360
    %v393 = vpack.c.b16 %v378, %v377
    %v394 = vpack.c.b16 %v380, %v379
    %v395 = vpack.c.b16 %v382, %v381
    %v396 = vpack.c.b16 %v384, %v383
    %v397 = vpack.c.b16 %v386, %v385
    %v398 = vpack.c.b16 %v388, %v387
    %v399 = vpack.c.b16 %v390, %v389
    %v400 = vpack.c.b16 %v392, %v391
    %409 = vmatpush.bf16.msra.mxu0 %v400
    %410 = vmatpush.bf16.msra.mxu0 %v399
    %411 = vmatpush.bf16.msra.mxu0 %v398
    %412 = vmatpush.bf16.msra.mxu0 %v397
    %413 = vmatpush.bf16.msra.mxu0 %v396
    %414 = vmatpush.bf16.msra.mxu0 %v395
    %415 = vmatpush.bf16.msra.mxu0 %v394
    %416 = vmatpush.bf16.msra.mxu0 %v393
    %417 = vmatmul.bf16.gmra.mxu0 %v344
    %v418 = vpop.f32.mrf.mxu0
    %v419 = vadd.f32 0.0, %v418
    %v420 = vpop.f32.mrf.mxu0
    %421 = vdwg.mxu0
    %v422 = vsub.f32 %v419, %v232
    %s423 = smul.u32 0, 8
    %v424 = vlaneseq
    %v425 = vshrl.u32 %v424, 7
    %v426 = vstv %s423
    %v427 = vadd.s32 %v426, %v425
    %vm428 = vcmp.lt.s32.totalorder %v427, 4
    %v429 = vmul.f32 %v422, %v422
    %v430 = vsel %vm428, %v429, 0.0
    %v431 = vrot.slane %v430, 4
    %v432 = vadd.f32 %v430, %v431
    %v433 = vrot.slane %v432, 2
    %v434 = vadd.f32 %v432, %v433
    %v435 = vrot.slane %v434, 1
    %v436 = vadd.f32 %v434, %v435
    %437 = vst [vmem:[%s13] sm:$0x1] %v436
    %v438 = vpack.c.bf16 %v419, %v419
    %v439 = vld [vmem:[#allocation7] sm:$0xf]
    %v440 = vld [vmem:[#allocation7 + $0x4] sm:$0xf]
    %v441 = vld [vmem:[#allocation7 + $0x8] sm:$0xf]
    %v442 = vld [vmem:[#allocation7 + $0xc] sm:$0xf]
    %v443 = vld [vmem:[#allocation7 + $0x10] sm:$0xf]
    %v444 = vld [vmem:[#allocation7 + $0x14] sm:$0xf]
    %v445 = vld [vmem:[#allocation7 + $0x18] sm:$0xf]
    %v446 = vld [vmem:[#allocation7 + $0x1c] sm:$0xf]
    %v447 = vld [vmem:[#allocation7 + $0x20] sm:$0xf]
    %v448 = vld [vmem:[#allocation7 + $0x24] sm:$0xf]
    %v449 = vld [vmem:[#allocation7 + $0x28] sm:$0xf]
    %v450 = vld [vmem:[#allocation7 + $0x2c] sm:$0xf]
    %v451 = vld [vmem:[#allocation7 + $0x30] sm:$0xf]
    %v452 = vld [vmem:[#allocation7 + $0x34] sm:$0xf]
    %v453 = vld [vmem:[#allocation7 + $0x38] sm:$0xf]
    %v454 = vld [vmem:[#allocation7 + $0x3c] sm:$0xf]
    %v455 = vld [vmem:[%s9] sm:$0x1]
    %v457 = vperm.slane %v455, 0
    %v475 = vunpack.c.l.b16 %v439
    %v476 = vunpack.c.l.b16 %v440
    %v477 = vunpack.c.l.b16 %v441
    %v478 = vunpack.c.l.b16 %v442
    %v479 = vunpack.c.l.b16 %v443
    %v480 = vunpack.c.l.b16 %v444
    %v481 = vunpack.c.l.b16 %v445
    %v482 = vunpack.c.l.b16 %v446
    %v483 = vunpack.c.l.b16 %v447
    %v484 = vunpack.c.l.b16 %v448
    %v485 = vunpack.c.l.b16 %v449
    %v486 = vunpack.c.l.b16 %v450
    %v487 = vunpack.c.l.b16 %v451
    %v488 = vunpack.c.l.b16 %v452
    %v489 = vunpack.c.l.b16 %v453
    %v490 = vunpack.c.l.b16 %v454
    %v491 = vpack.c.b16 %v476, %v475
    %v492 = vpack.c.b16 %v478, %v477
    %v493 = vpack.c.b16 %v480, %v479
    %v494 = vpack.c.b16 %v482, %v481
    %v495 = vpack.c.b16 %v484, %v483
    %v496 = vpack.c.b16 %v486, %v485
    %v497 = vpack.c.b16 %v488, %v487
    %v498 = vpack.c.b16 %v490, %v489
    %507 = vmatpush.bf16.msra.mxu0 %v498
    %508 = vmatpush.bf16.msra.mxu0 %v497
    %509 = vmatpush.bf16.msra.mxu0 %v496
    %510 = vmatpush.bf16.msra.mxu0 %v495
    %511 = vmatpush.bf16.msra.mxu0 %v494
    %512 = vmatpush.bf16.msra.mxu0 %v493
    %513 = vmatpush.bf16.msra.mxu0 %v492
    %514 = vmatpush.bf16.msra.mxu0 %v491
    %515 = vmatmul.bf16.gmra.mxu0 %v438
    %v516 = vpop.f32.mrf.mxu0
    %v517 = vadd.f32 %v457, %v516
    %v518 = vpop.f32.mrf.mxu0
    %519 = vdwg.mxu0
    %v520 = vmax.f32 %v517, 0.0
    %v521 = vpack.c.bf16 %v520, %v520
    %v522 = vld [vmem:[#allocation9] sm:$0xf]
    %v523 = vld [vmem:[#allocation9 + $0x4] sm:$0xf]
    %v524 = vld [vmem:[#allocation9 + $0x8] sm:$0xf]
    %v525 = vld [vmem:[#allocation9 + $0xc] sm:$0xf]
    %v526 = vld [vmem:[#allocation9 + $0x10] sm:$0xf]
    %v527 = vld [vmem:[#allocation9 + $0x14] sm:$0xf]
    %v528 = vld [vmem:[#allocation9 + $0x18] sm:$0xf]
    %v529 = vld [vmem:[#allocation9 + $0x1c] sm:$0xf]
    %v530 = vld [vmem:[#allocation9 + $0x20] sm:$0xf]
    %v531 = vld [vmem:[#allocation9 + $0x24] sm:$0xf]
    %v532 = vld [vmem:[#allocation9 + $0x28] sm:$0xf]
    %v533 = vld [vmem:[#allocation9 + $0x2c] sm:$0xf]
    %v534 = vld [vmem:[#allocation9 + $0x30] sm:$0xf]
    %v535 = vld [vmem:[#allocation9 + $0x34] sm:$0xf]
    %v536 = vld [vmem:[#allocation9 + $0x38] sm:$0xf]
    %v537 = vld [vmem:[#allocation9 + $0x3c] sm:$0xf]
    %v538 = vld [vmem:[%s11] sm:$0x1]
    %v540 = vperm.slane %v538, 0
    %v558 = vunpack.c.l.b16 %v522
    %v559 = vunpack.c.l.b16 %v523
    %v560 = vunpack.c.l.b16 %v524
    %v561 = vunpack.c.l.b16 %v525
    %v562 = vunpack.c.l.b16 %v526
    %v563 = vunpack.c.l.b16 %v527
    %v564 = vunpack.c.l.b16 %v528
    %v565 = vunpack.c.l.b16 %v529
    %v566 = vunpack.c.l.b16 %v530
    %v567 = vunpack.c.l.b16 %v531
    %v568 = vunpack.c.l.b16 %v532
    %v569 = vunpack.c.l.b16 %v533
    %v570 = vunpack.c.l.b16 %v534
    %v571 = vunpack.c.l.b16 %v535
    %v572 = vunpack.c.l.b16 %v536
    %v573 = vunpack.c.l.b16 %v537
    %v574 = vpack.c.b16 %v559, %v558
    %v575 = vpack.c.b16 %v561, %v560
    %v576 = vpack.c.b16 %v563, %v562
    %v577 = vpack.c.b16 %v565, %v564
    %v578 = vpack.c.b16 %v567, %v566
    %v579 = vpack.c.b16 %v569, %v568
    %v580 = vpack.c.b16 %v571, %v570
    %v581 = vpack.c.b16 %v573, %v572
    %590 = vmatpush.bf16.msra.mxu0 %v581
    %591 = vmatpush.bf16.msra.mxu0 %v580
    %592 = vmatpush.bf16.msra.mxu0 %v579
    %593 = vmatpush.bf16.msra.mxu0 %v578
    %594 = vmatpush.bf16.msra.mxu0 %v577
    %595 = vmatpush.bf16.msra.mxu0 %v576
    %596 = vmatpush.bf16.msra.mxu0 %v575
    %597 = vmatpush.bf16.msra.mxu0 %v574
    %598 = vmatmul.bf16.gmra.mxu0 %v521
    %v599 = vpop.f32.mrf.mxu0
    %v600 = vadd.f32 %v540, %v599
    %v601 = vpop.f32.mrf.mxu0
    %602 = vdwg.mxu0
    %v603 = vsub.f32 0.0, %v600
    %v604 = vmul.f32 %v603, 1.442695
    %v605 = vpow.pop %v604
    %v606 = vadd.f32 %v605, 1.0
    %v607 = vrcp.pop %v606
    %608 = vst [vmem:[%s12] sm:$0xff] %v607
    // Predicated region
    $region70: #{_forward_impl.1} parent=1 // pred_check
      _
    $region71: #{_forward_impl.1} parent=1 // pred_check_branch
      %610 = sbr.rel (0) target = $region73
    $region72: #{_forward_impl.1} parent=1 // pred_region
      _
    $region73: #{_forward_impl.1} parent=1 // pred_fallthru
      _
    // Predicated region
    $region74: #{_forward_impl.1} parent=1 // pred_check
      _
    $region75: #{_forward_impl.1} parent=1 // pred_check_branch
      %612 = sbr.rel (0) target = $region77
    $region76: #{_forward_impl.1} parent=1 // pred_region
      _
    $region77: #{_forward_impl.1} parent=1 // pred_fallthru
      _
    // Predicated region
    $region78: #{_forward_impl.1} parent=1 // pred_check
      _
    $region79: #{_forward_impl.1} parent=1 // pred_check_branch
      %614 = sbr.rel (0) target = $region81
    $region80: #{_forward_impl.1} parent=1 // pred_region
      _
    $region81: #{_forward_impl.1} parent=1 // pred_fallthru
      _
    // Predicated region
    $region82: #{_forward_impl.1} parent=1 // pred_check
      _
    $region83: #{_forward_impl.1} parent=1 // pred_check_branch
      %616 = sbr.rel (0) target = $region85
    $region84: #{_forward_impl.1} parent=1 // pred_region
      _
    $region85: #{_forward_impl.1} parent=1 // pred_fallthru
      _
    %617 = vsyncpa [#allocation3], 1
    %618 = vsyncpa [#allocation5], 1
    %619 = vsyncpa [#allocation8], 1

</llo_original>
